<compile_context>
chip_gen: v7x
topology: tpu7x:2x2x1
jax: 0.10.0
libtpu: 0.0.40
codegen_flags: <defaults>
</compile_context>

<pallas_src>
import functools

import jax
import jax.numpy as jnp
import numpy as np
from jax import lax
from jax.experimental import pallas as pl
from jax.experimental.pallas import tpu as pltpu

_LANE = 128


def _pe_add_dropout_kernel(seed_ref, pe_ref, x_ref, o_ref, *,
                           keep_threshold24, keep_scale, apply_dropout,
                           plane_elems, block_batch, block_rows, cols,
                           batch_major):
    """o = dropout(x + pe) for one (bb, tile_r, C) block.

    pe_ref : (tile_r_or_R, C) f32 slab of the (batch-invariant) positional table.
    x_ref / o_ref : (bb, tile_r, C) input / output slabs.
    """
    # Combine in f32 (the PyTorch module adds a float table); downcast at store.
    y = x_ref[...].astype(jnp.float32) + pe_ref[...][None, :, :]

    if apply_dropout:
        # Stateless counter-based dropout: hash(global element index ^ seed).
        # Pure VPU integer ops -> works on TPU Mosaic *and* interpret mode,
        # and the mask does not depend on the tiling choice.
        # TODO(synk): on real TPU, pltpu.prng_random_bits (8 bits/elem) would
        # cut the VALU work further, but it has no interpret-mode lowering.
        if batch_major:
            base = pl.program_id(0) * (block_batch * plane_elems)
        else:
            base = (pl.program_id(1) * plane_elems
                    + pl.program_id(0) * (block_rows * cols))
        shape = y.shape
        bi = lax.broadcasted_iota(jnp.int32, shape, 0)
        ri = lax.broadcasted_iota(jnp.int32, shape, 1)
        ci = lax.broadcasted_iota(jnp.int32, shape, 2)
        gidx = base + bi * plane_elems + ri * cols + ci
        h = gidx.astype(jnp.uint32) ^ seed_ref[0].astype(jnp.uint32)
        # lowbias32 finalizer (good avalanche).
        h = h * jnp.uint32(0x9E3779B9)
        h = (h ^ (h >> jnp.uint32(16))) * jnp.uint32(0x7FEB352D)
        h = (h ^ (h >> jnp.uint32(15))) * jnp.uint32(0x846CA68B)
        h = h ^ (h >> jnp.uint32(16))
        # Compare the top 24 bits as non-negative int32 (avoids unsigned cmp).
        h24 = (h >> jnp.uint32(8)).astype(jnp.int32)
        keep = h24 >= jnp.int32(keep_threshold24)          # P(keep) = 1 - p
        y = jnp.where(keep, y * jnp.float32(keep_scale), jnp.float32(0.0))

    o_ref[...] = y.astype(o_ref.dtype)


def _build_pe_table(T, E, train_seq_len):
    """Vectorized port of PositionalEncoding.encode -> (T, E) float32."""
    if T != train_seq_len:
        pos = np.linspace(0.0, train_seq_len - 1, num=T, dtype=np.float64)
    else:
        pos = np.arange(T, dtype=np.float64)
    d = np.arange(E, dtype=np.float64)
    angle = pos[:, None] / (10000.0 ** (d / E))[None, :]
    # even embed index -> sin, odd embed index -> cos (matches the module)
    pe = np.where((np.arange(E) % 2) == 0, np.sin(angle), np.cos(angle))
    return jnp.asarray(pe, dtype=jnp.float32)


def _vmem_capacity_bytes():
    try:
        return int(pltpu.get_tpu_info().vmem_capacity_bytes)
    except Exception:
        return 128 * 1024 * 1024


def _largest_divisor_tile(n, limit, multiple):
    """Largest t <= limit with t % multiple == 0, preferring divisors of n."""
    limit = max(multiple, (limit // multiple) * multiple)
    for t in range(limit, multiple - 1, -multiple):
        if n % t == 0:
            return t
    return limit          # tail block; Pallas masks the out-of-bounds rows


def positional_encoding_forward(x, train_seq_len, dout_p=0.0, seed=0):
    """Pallas equivalent of PositionalEncoding.forward.  x: (B, T, E)."""
    B, T, E = x.shape
    pe = _build_pe_table(T, E, train_seq_len)           # (T, E) f32, built once

    # ---- lane-dense layout: flatten each (T, E) plane to (R, 128) rows,
    # padding the tail so the output store is always a full-width vst.
    L = T * E
    R = pl.cdiv(L, _LANE)
    Lp = R * _LANE
    pad = Lp - L

    x_flat = x.reshape(B, L)
    pe_flat = pe.reshape(L)
    if pad:
        x_flat = jnp.pad(x_flat, ((0, 0), (0, pad)))
        pe_flat = jnp.pad(pe_flat, (0, pad))
    x_r = x_flat.reshape(B, R, _LANE)
    pe_r = pe_flat.reshape(R, _LANE)

    itemsize = jnp.dtype(x.dtype).itemsize
    plane = R * _LANE                                    # elements per batch item

    # ---- block sizing: ~2 MiB (f32-equivalent) per x/out block so each grid
    # step is a large DMA (>> 0.35us step overhead) while the double-buffered
    # working set still fits comfortably on v7x's 64 MiB VMEM.
    vmem_cap = _vmem_capacity_bytes()
    target_elems = (2 << 20) // 4

    if plane <= target_elems:
        # Small per-batch slab: whole plane per block, fold batches into the
        # block.  PE block index is constant -> the table is DMA'd only once.
        tile_r = R
        bb = max(1, min(B, target_elems // plane))
        while B % bb:
            bb -= 1
        grid = (B // bb,)
        batch_major = True
        pe_spec = pl.BlockSpec((R, _LANE), lambda b, s: (0, 0))
        x_spec = pl.BlockSpec((bb, R, _LANE), lambda b, s: (b, 0, 0))
        o_spec = pl.BlockSpec((bb, R, _LANE), lambda b, s: (b, 0, 0))
        dims = ("parallel",)
    else:
        # Large per-batch slab: tile rows, row-tile axis outermost so the PE
        # slab stays resident across the inner batch loop; num_r_tiles >= 2 so
        # both TensorCores get work on the outer parallel axis.
        bb = 1
        tile_r = min(R, _largest_divisor_tile(R, target_elems // _LANE, 8))
        grid = (pl.cdiv(R, tile_r), B)
        batch_major = False
        pe_spec = pl.BlockSpec((tile_r, _LANE), lambda r, b, s: (r, 0))
        x_spec = pl.BlockSpec((1, tile_r, _LANE), lambda r, b, s: (b, r, 0))
        o_spec = pl.BlockSpec((1, tile_r, _LANE), lambda r, b, s: (b, r, 0))
        dims = ("parallel", "parallel")

    apply_dropout = float(dout_p) > 0.0
    keep_scale = 1.0 / (1.0 - float(dout_p)) if apply_dropout else 1.0
    keep_threshold24 = min(int(round(float(dout_p) * (1 << 24))), (1 << 24) - 1)

    kernel = functools.partial(
        _pe_add_dropout_kernel,
        keep_threshold24=keep_threshold24,
        keep_scale=keep_scale,
        apply_dropout=apply_dropout,
        plane_elems=plane,
        block_batch=bb,
        block_rows=tile_r,
        cols=_LANE,
        batch_major=batch_major,
    )

    blk_io = bb * tile_r * _LANE * itemsize
    blk_f32 = bb * tile_r * _LANE * 4
    blk_pe = (R if batch_major else tile_r) * _LANE * 4
    vmem_budget = (40 << 20) if vmem_cap <= (64 << 20) else (96 << 20)
    vmem_limit = int(min(vmem_budget,
                         max(8 << 20,
                             4 * blk_io + 2 * blk_pe + 4 * blk_f32 + (2 << 20))))

    cost = pl.CostEstimate(
        flops=4 * B * T * E,                             # add + mask/scale
        transcendentals=0,                               # PE precomputed
        bytes_accessed=2 * B * Lp * itemsize + Lp * 4,
    )

    seed_arr = jnp.array([seed], dtype=jnp.int32)

    out = pl.pallas_call(
        kernel,
        out_shape=jax.ShapeDtypeStruct((B, R, _LANE), x.dtype),
        grid_spec=pltpu.PrefetchScalarGridSpec(
            num_scalar_prefetch=1,                       # dropout seed -> SMEM
            grid=grid,
            in_specs=[pe_spec, x_spec],
            out_specs=o_spec,
        ),
        compiler_params=pltpu.CompilerParams(
            dimension_semantics=dims,
            vmem_limit_bytes=vmem_limit,
        ),
        cost_estimate=cost,
    )(seed_arr, pe_r, x_r)

    out = out.reshape(B, Lp)
    if pad:
        out = out[:, :L]
    return out.reshape(B, T, E)


def _reference_pe(T, E, train_len=None):
    """Direct NumPy port of PositionalEncoding.encode for verification."""
    odds = np.arange(0, E, 2)
    evens = np.arange(1, E, 2)
    pe = np.zeros((T, E))
    pos_list = np.arange(T) if train_len is None else np.linspace(0, train_len - 1, num=T)
    for i, pos in enumerate(pos_list):
        pe[i, odds] = np.sin(pos / 10000 ** (odds / E))
        pe[i, evens] = np.cos(pos / 10000 ** (evens / E))
    return pe.astype(np.float32)


if __name__ == "__main__":
    B, T, E = 2, 8, 32              # batch=2, seq=8 frames, embed=32
    TRAIN_NUM_FRAMES = 8            # cfg.TRAIN.NUM_FRAMES

    key = jax.random.PRNGKey(0)
    x = jax.random.normal(key, (B, T, E), dtype=jnp.float32)

    # 1) deterministic path (dropout disabled), T == cfg.TRAIN.NUM_FRAMES
    out = positional_encoding_forward(x, TRAIN_NUM_FRAMES, dout_p=0.0, seed=0)
    out = jax.block_until_ready(out)
    ref = np.asarray(x) + _reference_pe(T, E)[None]
    np.testing.assert_allclose(np.asarray(out), ref, atol=1e-5, rtol=1e-5)

    # 2) T != seq_len branch (linspace positions) + lane-padding path (T*E=192)
    x2 = jax.random.normal(jax.random.PRNGKey(1), (B, 6, E), dtype=jnp.float32)
    out2 = jax.block_until_ready(
        positional_encoding_forward(x2, TRAIN_NUM_FRAMES, dout_p=0.0, seed=0))
    ref2 = np.asarray(x2) + _reference_pe(6, E, train_len=TRAIN_NUM_FRAMES)[None]
    np.testing.assert_allclose(np.asarray(out2), ref2, atol=1e-5, rtol=1e-5)

    # 3) dropout path: every element is either exactly 0 or (x + pe) / (1 - p)
    p = 0.5
    out3 = jax.block_until_ready(
        positional_encoding_forward(x, TRAIN_NUM_FRAMES, dout_p=p, seed=123))
    out3 = np.asarray(out3)
    scaled = ref / (1.0 - p)
    is_zero = (out3 == 0.0)
    keep_ok = np.isclose(out3, scaled, atol=1e-5, rtol=1e-5)
    assert np.all(is_zero | keep_ok), "dropout produced unexpected values"
    frac_zero = float(is_zero.mean())
    assert 0.15 < frac_zero < 0.85, f"dropout zero fraction {frac_zero} implausible"

    print("KERNEL_OK")
</pallas_src>

<mosaic_0001>
module attributes {stable_mosaic.version = 11 : i64} {
  func.func @_pe_add_dropout_kernel(%arg0: i32, %arg1: memref<1xi32, #tpu.memory_space<smem>>, %arg2: memref<2x128xf32, #tpu.memory_space<vmem>>, %arg3: memref<2x2x128xf32, #tpu.memory_space<vmem>>, %arg4: memref<2x2x128xf32, #tpu.memory_space<vmem>>) attributes {dimension_semantics = [#tpu.dimension_semantics<parallel>], iteration_bounds = array<i64: 1>, scalar_prefetch = 1 : i64, scratch_operands = 0 : i64, tpu.core_type = #tpu.core_type<tc>, window_params = [{pipeline_mode = #tpu.pipeline_mode<synchronous>, transform_indices = @transform_0, window_bounds = array<i64: 2, 128>}, {transform_indices = @transform_1, window_bounds = array<i64: 2, 2, 128>}, {transform_indices = @transform_2, window_bounds = array<i64: 2, 2, 128>}]} {
    %c0 = arith.constant 0 : index
    %c0_0 = arith.constant 0 : index
    %c0_1 = arith.constant 0 : index
    %0 = vector.load %arg3[%c0, %c0_0, %c0_1] : memref<2x2x128xf32, #tpu.memory_space<vmem>>, vector<2x2x128xf32>
    %c0_2 = arith.constant 0 : index
    %c0_3 = arith.constant 0 : index
    %1 = vector.load %arg2[%c0_2, %c0_3] : memref<2x128xf32, #tpu.memory_space<vmem>>, vector<2x128xf32>
    %2 = vector.shape_cast %1 : vector<2x128xf32> to vector<1x2x128xf32>
    %3 = vector.broadcast %2 : vector<1x2x128xf32> to vector<2x2x128xf32>
    %4 = arith.addf %0, %3 : vector<2x2x128xf32>
    %c0_4 = arith.constant 0 : index
    %c0_5 = arith.constant 0 : index
    %c0_6 = arith.constant 0 : index
    %5 = vector.load %arg4[%c0_4, %c0_5, %c0_6] : memref<2x2x128xf32, #tpu.memory_space<vmem>>, vector<2x2x128xf32>
    tpu.vector_store %arg4[%c0_4, %c0_5, %c0_6], %4 {strides = array<i32>} : memref<2x2x128xf32, #tpu.memory_space<vmem>>, vector<2x2x128xf32>,
    return
  }
  func.func @transform_0(%arg0: i32, %arg1: memref<1xi32, #tpu.memory_space<smem>>) -> (i32, i32) {
    %c0_i32 = arith.constant 0 : i32
    %c0_i32_0 = arith.constant 0 : i32
    %c0_i32_1 = arith.constant 0 : i32
    return %c0_i32, %c0_i32_0 : i32, i32
  }
  func.func @transform_1(%arg0: i32, %arg1: memref<1xi32, #tpu.memory_space<smem>>) -> (i32, i32, i32) {
    %c0_i32 = arith.constant 0 : i32
    %c0_i32_0 = arith.constant 0 : i32
    %c0_i32_1 = arith.constant 0 : i32
    return %arg0, %c0_i32, %c0_i32_0 : i32, i32, i32
  }
  func.func @transform_2(%arg0: i32, %arg1: memref<1xi32, #tpu.memory_space<smem>>) -> (i32, i32, i32) {
    %c0_i32 = arith.constant 0 : i32
    %c0_i32_0 = arith.constant 0 : i32
    %c0_i32_1 = arith.constant 0 : i32
    return %arg0, %c0_i32, %c0_i32_0 : i32, i32, i32
  }
}

</mosaic_0001>

<llo_original>
// kernel: tpu_custom_call.1
$region0: #{tpu_custom_call.1}
  #allocation0 [shape = 'u32[]', space=smem, size = 0x4, offset = 0x4, fixed_abs, tag = 'smem constant byte address 0x4 - core index']
  #allocation1 [shape = 'u32[144,128]{1,0:T(1,128)}', space=vmem, size = 0x12000, scoped, tag = 'internal scratch']
  #allocation2 [shape = 's32[1]{0}', space=sflag, size = 0x4, scoped, tag = 'scoped memory for tpu_custom_call.1']
  #allocation3 [shape = 's32[1]{0:T(128)S(6)}', space=smem, size = 0x200, scoped, tag = 'prefetched SMEM operand 0']
  %s0 = inlined_call_operand.<no memory space> [shape: s32[1], index: 0, kind: input, shape index: {}]
  %s1 = inlined_call_operand.vmem [shape: f32[2,128], index: 1, kind: input, shape index: {}]
  %s2 = inlined_call_operand.vmem [shape: f32[2,2,128], index: 2, kind: input, shape index: {}]
  %s3 = inlined_call_operand.hbm [shape: f32[2,2,128], index: 3, kind: output, shape index: {}]
  %s4 = sld [smem:[#allocation0]]
  $region18: #{tpu_custom_call.1} parent=0
    _
  %s6 = ssub.s32 1, %s4
  %s7 = scalar_select 0, %s6, %s4
  %8 = sst [smem:[#allocation3]] %s0
  $region1: #{tpu_custom_call.1} parent=0
    #allocation4 [shape = 'u8[2048]{0}', space=vmem, size = 0x800, scoped, tag = 'output window, operand 0, single buffered']
    #allocation5 [shape = 's32[1]{0}', space=sflag, size = 0x4, scoped, tag = 'scoped memory for tpu_custom_call.1']
    %9 = vsyncpa [#allocation5], 0
    // Predicated region
    $region2: #{tpu_custom_call.1} parent=1 // pred_check
      _
    $region3: #{tpu_custom_call.1} parent=1 // pred_check_branch
      %11 = sbr.rel (0) target = $region5
    $region4: #{tpu_custom_call.1} parent=1 // pred_region
      _
    $region5: #{tpu_custom_call.1} parent=1 // pred_fallthru
      _
    // Predicated region
    $region6: #{tpu_custom_call.1} parent=1 // pred_check
      _
    $region7: #{tpu_custom_call.1} parent=1 // pred_check_branch
      %13 = sbr.rel (0) target = $region9
    $region8: #{tpu_custom_call.1} parent=1 // pred_region
      _
    $region9: #{tpu_custom_call.1} parent=1 // pred_fallthru
      _
    %v14 = vld [vmem:[%s2] sm:$0x3]
    %v15 = vld [vmem:[%s2 + $0x2] sm:$0x3]
    %v16 = vld [vmem:[%s1] sm:$0x3]
    %v17 = vadd.f32 %v14, %v16
    %v18 = vadd.f32 %v15, %v16
    %19 = vst [vmem:[#allocation4] sm:$0x3] %v17
    %20 = vst [vmem:[#allocation4 + $0x2] sm:$0x3] %v18
    // Predicated region
    $region10: #{tpu_custom_call.1} parent=1 // pred_check
      _
    $region11: #{tpu_custom_call.1} parent=1 // pred_check_branch
      %22 = sbr.rel (0) target = $region13
    $region12: #{tpu_custom_call.1} parent=1 // pred_region
      %s24 = ssub.s32 64, 64
      %25 = vsyncadd [#allocation5], %s24
      %s26 = sshll.u32 [#allocation4], 4
      %s27 = int_to_ptr.vmem [resolvable:$true] %s26
      %32 = dma.vmem_to_hbm [thread:$0]  %s27, 64, %s3, [#allocation5], 32, 32, 2
    $region13: #{tpu_custom_call.1} parent=1 // pred_fallthru
      _
    // Predicated region
    $region14: #{tpu_custom_call.1} parent=1 // pred_check
      _
    $region15: #{tpu_custom_call.1} parent=1 // pred_check_branch
      %34 = sbr.rel (0) target = $region17
    $region16: #{tpu_custom_call.1} parent=1 // pred_region
      %35 = dma.done [#allocation5], 64
    $region17: #{tpu_custom_call.1} parent=1 // pred_fallthru
      _
    %36 = vsyncpa [#allocation5], 1

</llo_original>
